<compile_context>
chip_gen: v7x
topology: tpu7x:2x2x1
jax: 0.10.0
libtpu: 0.0.40
codegen_flags: <defaults>
</compile_context>

<pallas_src>
import jax
import jax.numpy as jnp
from jax import lax
from jax.experimental import pallas as pl
from jax.experimental.pallas import tpu as pltpu

LANE = 128


def _round_up(x, m):
    return (x + m - 1) // m * m


def _num_tensorcores():
    """Best-effort TC-per-chip detection (v7x has 2, v5e/v6e have 1)."""
    try:
        kind = jax.devices()[0].device_kind.lower()
    except Exception:
        return 1
    return 2 if ("v7" in kind or "7x" in kind) else 1


# ---------------------------------------------------------------------------
# Pallas kernel: fused 4-layer MLP (split first matmul, relu x3, final linear
# computed transposed so the output row is lane-dense over the batch).
# ---------------------------------------------------------------------------
def soft_q_kernel(state_ref, action_ref,
                  w1s_ref, w1a_ref, b123_ref,
                  w2_ref, w3_ref, w4_ref, b4_ref,
                  out_ref):
    f32 = jnp.float32
    bf16 = jnp.bfloat16

    b1 = b123_ref[0:1, :]
    b2 = b123_ref[1:2, :]
    b3 = b123_ref[2:3, :]

    # Layer 1: concat folded into two MXU dots summed.
    h = (jnp.dot(state_ref[...], w1s_ref[...], preferred_element_type=f32)
         + jnp.dot(action_ref[...], w1a_ref[...], preferred_element_type=f32)
         + b1)
    h = jnp.maximum(h, 0.0).astype(bf16)                      # (TB, Hp)

    # Layer 2
    h = jnp.dot(h, w2_ref[...], preferred_element_type=f32) + b2
    h = jnp.maximum(h, 0.0).astype(bf16)                      # (TB, Hp)

    # Layer 3
    h = jnp.dot(h, w3_ref[...], preferred_element_type=f32) + b3
    h = jnp.maximum(h, 0.0).astype(bf16)                      # (TB, Hp)

    # Layer 4, transposed: (1, Hp) . (TB, Hp)^T -> (1, TB); batch on lanes so
    # the store is a full-width, unmasked f32 row (4 B per batch element).
    q_row = lax.dot_general(
        w4_ref[...], h,
        dimension_numbers=(((1,), (1,)), ((), ())),
        preferred_element_type=f32) + b4_ref[0, 0]
    out_ref[...] = q_row                                      # (1, TB)


# ---------------------------------------------------------------------------
# One-time host-side packing: split/pad/cast weights for the kernel layout.
# ---------------------------------------------------------------------------
def pack_params(params, num_inputs):
    bf16 = jnp.bfloat16
    f32 = jnp.float32
    w1, b1 = params["w1"], params["b1"]            # (d_in, H), (1, H)
    H = w1.shape[1]
    Hp = _round_up(H, LANE)
    ph = Hp - H

    w1s = jnp.pad(w1[:num_inputs], ((0, 0), (0, ph))).astype(bf16)
    w1a = jnp.pad(w1[num_inputs:], ((0, 0), (0, ph))).astype(bf16)

    # Biases 1..3 packed into a single (8, Hp) f32 tile (rows 0..2 used).
    b123 = jnp.zeros((8, Hp), f32)
    b123 = b123.at[0, :H].set(params["b1"][0].astype(f32))
    b123 = b123.at[1, :H].set(params["b2"][0].astype(f32))
    b123 = b123.at[2, :H].set(params["b3"][0].astype(f32))

    w2p = jnp.pad(params["w2"], ((0, ph), (0, ph))).astype(bf16)
    w3p = jnp.pad(params["w3"], ((0, ph), (0, ph))).astype(bf16)

    # (H, 1) -> (1, Hp): final layer kept as a single lane-dense bf16 row.
    w4p = jnp.pad(params["w4"].T, ((0, 0), (0, ph))).astype(bf16)
    b4p = params["b4"].reshape(1, 1).astype(f32)               # SMEM scalar

    return dict(w1s=w1s, w1a=w1a, b123=b123, w2=w2p, w3=w3p, w4=w4p, b4=b4p)


# ---------------------------------------------------------------------------
# Wrapper: batch-tiled pallas_call
# ---------------------------------------------------------------------------
def soft_q_forward(state, action, pk, *, num_tiles=None):
    B, ni = state.shape
    na = action.shape[1]
    Hp = pk["w2"].shape[0]

    # Grid sizing: one tile per TensorCore (2 on v7x) when the batch is big
    # enough, otherwise a single grid step (grid == serial loop on 1-TC chips).
    if num_tiles is None:
        cores = _num_tensorcores()
        num_tiles = cores if B >= cores * LANE else 1

    TB = _round_up(-(-B // num_tiles), LANE)        # multiple of 128 (lane-dense)
    Bp = TB * num_tiles
    if Bp != B:
        state = jnp.pad(state, ((0, Bp - B), (0, 0)))
        action = jnp.pad(action, ((0, Bp - B), (0, 0)))
    state = state.astype(jnp.bfloat16)
    action = action.astype(jnp.bfloat16)

    grid = (num_tiles,)

    def resident(shape):
        return pl.BlockSpec(shape, lambda i: (0, 0))

    in_specs = [
        pl.BlockSpec((TB, ni), lambda i: (i, 0)),            # state tile
        pl.BlockSpec((TB, na), lambda i: (i, 0)),            # action tile
        resident(pk["w1s"].shape),                            # w1_s
        resident(pk["w1a"].shape),                            # w1_a
        resident(pk["b123"].shape),                           # b1/b2/b3 tile
        resident(pk["w2"].shape),                             # w2
        resident(pk["w3"].shape),                             # w3
        resident(pk["w4"].shape),                             # w4 (1, Hp)
        pl.BlockSpec(memory_space=pltpu.MemorySpace.SMEM),    # b4 scalar
    ]
    # Output: (num_tiles, 1, TB) f32, each grid step writes one lane-dense row.
    out_spec = pl.BlockSpec((None, 1, TB), lambda i: (i, 0, 0))

    flops = 2 * Bp * ((ni + na) * Hp + 2 * Hp * Hp + Hp)
    weight_bytes = ((ni + na) * Hp + 2 * Hp * Hp + Hp) * 2 + (8 * Hp + 1) * 4
    bytes_accessed = Bp * (ni + na) * 2 + weight_bytes + Bp * 4

    out = pl.pallas_call(
        soft_q_kernel,
        out_shape=jax.ShapeDtypeStruct((num_tiles, 1, TB), jnp.float32),
        grid=grid,
        in_specs=in_specs,
        out_specs=out_spec,
        compiler_params=pltpu.CompilerParams(
            dimension_semantics=("parallel",)),
        cost_estimate=pl.CostEstimate(
            flops=flops, transcendentals=0, bytes_accessed=bytes_accessed),
    )(state, action,
      pk["w1s"], pk["w1a"], pk["b123"],
      pk["w2"], pk["w3"], pk["w4"], pk["b4"])

    return out.reshape(-1)[:B].reshape(B, 1)                  # (B, 1)


# ---------------------------------------------------------------------------
# Deterministic parameter initialization (mirrors nn.Linear defaults +
# the uniform(-init_w, init_w) override on linear4). Weights are (in, out).
# ---------------------------------------------------------------------------
def init_params(key, num_inputs, num_actions, hidden_size, init_w=0.003):
    d_in = num_inputs + num_actions

    def linear_init(k, fan_in, fan_out):
        kw, kb = jax.random.split(k)
        bound = 1.0 / jnp.sqrt(jnp.float32(fan_in))
        w = jax.random.uniform(kw, (fan_in, fan_out), jnp.float32, -bound, bound)
        b = jax.random.uniform(kb, (1, fan_out), jnp.float32, -bound, bound)
        return w, b

    k1, k2, k3, k4 = jax.random.split(key, 4)
    w1, b1 = linear_init(k1, d_in, hidden_size)
    w2, b2 = linear_init(k2, hidden_size, hidden_size)
    w3, b3 = linear_init(k3, hidden_size, hidden_size)

    kw4, kb4 = jax.random.split(k4)
    w4 = jax.random.uniform(kw4, (hidden_size, 1), jnp.float32, -init_w, init_w)
    b4 = jax.random.uniform(kb4, (1, 1), jnp.float32, -init_w, init_w)

    return dict(w1=w1, b1=b1, w2=w2, b2=b2, w3=w3, b3=b3, w4=w4, b4=b4)


# ---------------------------------------------------------------------------
# References for verification
# ---------------------------------------------------------------------------
def soft_q_ref_fp32(state, action, p):
    x = jnp.concatenate([state, action], axis=1)
    x = jnp.maximum(x @ p["w1"] + p["b1"], 0.0)
    x = jnp.maximum(x @ p["w2"] + p["b2"], 0.0)
    x = jnp.maximum(x @ p["w3"] + p["b3"], 0.0)
    return x @ p["w4"] + p["b4"]


def soft_q_ref_packed(state, action, pk):
    """Pure-JAX mirror of the kernel's bf16-operand / f32-accumulate math."""
    f32, bf16 = jnp.float32, jnp.bfloat16
    s, a = state.astype(bf16), action.astype(bf16)
    h = (jnp.dot(s, pk["w1s"], preferred_element_type=f32)
         + jnp.dot(a, pk["w1a"], preferred_element_type=f32)
         + pk["b123"][0:1, :])
    h = jnp.maximum(h, 0.0).astype(bf16)
    h = jnp.dot(h, pk["w2"], preferred_element_type=f32) + pk["b123"][1:2, :]
    h = jnp.maximum(h, 0.0).astype(bf16)
    h = jnp.dot(h, pk["w3"], preferred_element_type=f32) + pk["b123"][2:3, :]
    h = jnp.maximum(h, 0.0).astype(bf16)
    q = jnp.dot(h, pk["w4"].T, preferred_element_type=f32) + pk["b4"][0, 0]
    return q


if __name__ == "__main__":
    # Small shapes consistent with the script (state dim 43, a few actions,
    # modest hidden size, small batch).
    num_inputs, num_actions, hidden_size, batch = 43, 5, 32, 4

    key = jax.random.PRNGKey(0)
    k_params, k_state, k_action = jax.random.split(key, 3)

    params = init_params(k_params, num_inputs, num_actions, hidden_size)
    packed = pack_params(params, num_inputs)

    state = jax.random.normal(k_state, (batch, num_inputs), jnp.float32)
    action = jax.random.normal(k_action, (batch, num_actions), jnp.float32)

    q = soft_q_forward(state, action, packed)
    q = jax.block_until_ready(q)
    assert q.shape == (batch, 1)

    # Tight check vs. an exact pure-JAX mirror of the kernel's bf16/f32 math.
    q_mirror = soft_q_ref_packed(state, action, packed)
    assert jnp.allclose(q, q_mirror, atol=1e-4, rtol=1e-3), "mismatch vs bf16 mirror"

    # Loose check vs. the full-fp32 PyTorch-equivalent reference (bf16 quantization).
    q_fp32 = soft_q_ref_fp32(state, action, params)
    assert jnp.allclose(q, q_fp32, atol=2e-2, rtol=2e-2), "mismatch vs fp32 reference"

    print("KERNEL_OK")
</pallas_src>

<mosaic_0001>
module attributes {stable_mosaic.version = 11 : i64} {
  func.func @soft_q_kernel(%arg0: i32, %arg1: memref<128x43xbf16, #tpu.memory_space<vmem>>, %arg2: memref<128x5xbf16, #tpu.memory_space<vmem>>, %arg3: memref<43x128xbf16, #tpu.memory_space<vmem>>, %arg4: memref<5x128xbf16, #tpu.memory_space<vmem>>, %arg5: memref<8x128xf32, #tpu.memory_space<vmem>>, %arg6: memref<128x128xbf16, #tpu.memory_space<vmem>>, %arg7: memref<128x128xbf16, #tpu.memory_space<vmem>>, %arg8: memref<1x128xbf16, #tpu.memory_space<vmem>>, %arg9: memref<1x1xf32, #tpu.memory_space<smem>>, %arg10: memref<1x1x128xf32, #tpu.memory_space<vmem>>) attributes {dimension_semantics = [#tpu.dimension_semantics<parallel>], iteration_bounds = array<i64: 1>, scalar_prefetch = 0 : i64, scratch_operands = 0 : i64, tpu.core_type = #tpu.core_type<tc>, window_params = [{transform_indices = @transform_0, window_bounds = array<i64: 128, 43>}, {transform_indices = @transform_1, window_bounds = array<i64: 128, 5>}, {pipeline_mode = #tpu.pipeline_mode<synchronous>, transform_indices = @transform_2, window_bounds = array<i64: 43, 128>}, {pipeline_mode = #tpu.pipeline_mode<synchronous>, transform_indices = @transform_3, window_bounds = array<i64: 5, 128>}, {pipeline_mode = #tpu.pipeline_mode<synchronous>, transform_indices = @transform_4, window_bounds = array<i64: 8, 128>}, {pipeline_mode = #tpu.pipeline_mode<synchronous>, transform_indices = @transform_5, window_bounds = array<i64: 128, 128>}, {pipeline_mode = #tpu.pipeline_mode<synchronous>, transform_indices = @transform_6, window_bounds = array<i64: 128, 128>}, {pipeline_mode = #tpu.pipeline_mode<synchronous>, transform_indices = @transform_7, window_bounds = array<i64: 1, 128>}, {transform_indices = @transform_8, window_bounds = array<i64: 1, 1>}, {transform_indices = @transform_9, window_bounds = array<i64: 1, 1, 128>}]} {
    %c0 = arith.constant 0 : index
    %c0_0 = arith.constant 0 : index
    %0 = vector.load %arg5[%c0, %c0_0] : memref<8x128xf32, #tpu.memory_space<vmem>>, vector<1x128xf32>
    %c1 = arith.constant 1 : index
    %c0_1 = arith.constant 0 : index
    %1 = vector.load %arg5[%c1, %c0_1] : memref<8x128xf32, #tpu.memory_space<vmem>>, vector<1x128xf32>
    %c2 = arith.constant 2 : index
    %c0_2 = arith.constant 0 : index
    %2 = vector.load %arg5[%c2, %c0_2] : memref<8x128xf32, #tpu.memory_space<vmem>>, vector<1x128xf32>
    %c0_3 = arith.constant 0 : index
    %c0_4 = arith.constant 0 : index
    %3 = vector.load %arg1[%c0_3, %c0_4] : memref<128x43xbf16, #tpu.memory_space<vmem>>, vector<128x43xbf16>
    %c0_5 = arith.constant 0 : index
    %c0_6 = arith.constant 0 : index
    %4 = vector.load %arg3[%c0_5, %c0_6] : memref<43x128xbf16, #tpu.memory_space<vmem>>, vector<43x128xbf16>
    %cst = arith.constant dense<0.000000e+00> : vector<128x128xf32>
    %5 = tpu.matmul %3, %4, %cst {dimension_numbers = #tpu.dot_dimension_numbers<[1], [0], [0], [1], [0, 0, 1, 1], [], []>} : vector<128x43xbf16>, vector<43x128xbf16>, vector<128x128xf32> -> vector<128x128xf32>
    %c0_7 = arith.constant 0 : index
    %c0_8 = arith.constant 0 : index
    %6 = vector.load %arg2[%c0_7, %c0_8] : memref<128x5xbf16, #tpu.memory_space<vmem>>, vector<128x5xbf16>
    %c0_9 = arith.constant 0 : index
    %c0_10 = arith.constant 0 : index
    %7 = vector.load %arg4[%c0_9, %c0_10] : memref<5x128xbf16, #tpu.memory_space<vmem>>, vector<5x128xbf16>
    %cst_11 = arith.constant dense<0.000000e+00> : vector<128x128xf32>
    %8 = tpu.matmul %6, %7, %cst_11 {dimension_numbers = #tpu.dot_dimension_numbers<[1], [0], [0], [1], [0, 0, 1, 1], [], []>} : vector<128x5xbf16>, vector<5x128xbf16>, vector<128x128xf32> -> vector<128x128xf32>
    %9 = arith.addf %5, %8 : vector<128x128xf32>
    %10 = vector.broadcast %0 : vector<1x128xf32> to vector<128x128xf32>
    %11 = arith.addf %9, %10 : vector<128x128xf32>
    %cst_12 = arith.constant 0.000000e+00 : f32
    %12 = vector.broadcast %cst_12 : f32 to vector<128x128xf32>
    %13 = arith.maximumf %11, %12 : vector<128x128xf32>
    %14 = arith.truncf %13 : vector<128x128xf32> to vector<128x128xbf16>
    %c0_13 = arith.constant 0 : index
    %c0_14 = arith.constant 0 : index
    %15 = vector.load %arg6[%c0_13, %c0_14] : memref<128x128xbf16, #tpu.memory_space<vmem>>, vector<128x128xbf16>
    %cst_15 = arith.constant dense<0.000000e+00> : vector<128x128xf32>
    %16 = tpu.matmul %14, %15, %cst_15 {dimension_numbers = #tpu.dot_dimension_numbers<[1], [0], [0], [1], [0, 0, 1, 1], [], []>} : vector<128x128xbf16>, vector<128x128xbf16>, vector<128x128xf32> -> vector<128x128xf32>
    %17 = vector.broadcast %1 : vector<1x128xf32> to vector<128x128xf32>
    %18 = arith.addf %16, %17 : vector<128x128xf32>
    %cst_16 = arith.constant 0.000000e+00 : f32
    %19 = vector.broadcast %cst_16 : f32 to vector<128x128xf32>
    %20 = arith.maximumf %18, %19 : vector<128x128xf32>
    %21 = arith.truncf %20 : vector<128x128xf32> to vector<128x128xbf16>
    %c0_17 = arith.constant 0 : index
    %c0_18 = arith.constant 0 : index
    %22 = vector.load %arg7[%c0_17, %c0_18] : memref<128x128xbf16, #tpu.memory_space<vmem>>, vector<128x128xbf16>
    %cst_19 = arith.constant dense<0.000000e+00> : vector<128x128xf32>
    %23 = tpu.matmul %21, %22, %cst_19 {dimension_numbers = #tpu.dot_dimension_numbers<[1], [0], [0], [1], [0, 0, 1, 1], [], []>} : vector<128x128xbf16>, vector<128x128xbf16>, vector<128x128xf32> -> vector<128x128xf32>
    %24 = vector.broadcast %2 : vector<1x128xf32> to vector<128x128xf32>
    %25 = arith.addf %23, %24 : vector<128x128xf32>
    %cst_20 = arith.constant 0.000000e+00 : f32
    %26 = vector.broadcast %cst_20 : f32 to vector<128x128xf32>
    %27 = arith.maximumf %25, %26 : vector<128x128xf32>
    %28 = arith.truncf %27 : vector<128x128xf32> to vector<128x128xbf16>
    %c0_21 = arith.constant 0 : index
    %c0_22 = arith.constant 0 : index
    %29 = vector.load %arg8[%c0_21, %c0_22] : memref<1x128xbf16, #tpu.memory_space<vmem>>, vector<1x128xbf16>
    %cst_23 = arith.constant dense<0.000000e+00> : vector<1x128xf32>
    %30 = tpu.matmul %29, %28, %cst_23 {dimension_numbers = #tpu.dot_dimension_numbers<[1], [1], [0], [0], [0, 0, 1, 0], [], []>} : vector<1x128xbf16>, vector<128x128xbf16>, vector<1x128xf32> -> vector<1x128xf32>
    %c0_24 = arith.constant 0 : index
    %c0_25 = arith.constant 0 : index
    %31 = memref.load %arg9[%c0_24, %c0_25] : memref<1x1xf32, #tpu.memory_space<smem>>
    %32 = vector.broadcast %31 : f32 to vector<1x128xf32>
    %33 = arith.addf %30, %32 : vector<1x128xf32>
    %c0_26 = arith.constant 0 : index
    %c0_27 = arith.constant 0 : index
    %c0_28 = arith.constant 0 : index
    %34 = vector.load %arg10[%c0_26, %c0_27, %c0_28] : memref<1x1x128xf32, #tpu.memory_space<vmem>>, vector<1x1x128xf32>
    %35 = vector.shape_cast %34 : vector<1x1x128xf32> to vector<1x128xf32>
    %36 = vector.shape_cast %33 : vector<1x128xf32> to vector<1x1x128xf32>
    tpu.vector_store %arg10[%c0_26, %c0_27, %c0_28], %36 {strides = array<i32>} : memref<1x1x128xf32, #tpu.memory_space<vmem>>, vector<1x1x128xf32>,
    return
  }
  func.func @transform_0(%arg0: i32) -> (i32, i32) {
    %c0_i32 = arith.constant 0 : i32
    %c0_i32_0 = arith.constant 0 : i32
    return %arg0, %c0_i32 : i32, i32
  }
  func.func @transform_1(%arg0: i32) -> (i32, i32) {
    %c0_i32 = arith.constant 0 : i32
    %c0_i32_0 = arith.constant 0 : i32
    return %arg0, %c0_i32 : i32, i32
  }
  func.func @transform_2(%arg0: i32) -> (i32, i32) {
    %c0_i32 = arith.constant 0 : i32
    %c0_i32_0 = arith.constant 0 : i32
    %c0_i32_1 = arith.constant 0 : i32
    return %c0_i32, %c0_i32_0 : i32, i32
  }
  func.func @transform_3(%arg0: i32) -> (i32, i32) {
    %c0_i32 = arith.constant 0 : i32
    %c0_i32_0 = arith.constant 0 : i32
    %c0_i32_1 = arith.constant 0 : i32
    return %c0_i32, %c0_i32_0 : i32, i32
  }
  func.func @transform_4(%arg0: i32) -> (i32, i32) {
    %c0_i32 = arith.constant 0 : i32
    %c0_i32_0 = arith.constant 0 : i32
    %c0_i32_1 = arith.constant 0 : i32
    return %c0_i32, %c0_i32_0 : i32, i32
  }
  func.func @transform_5(%arg0: i32) -> (i32, i32) {
    %c0_i32 = arith.constant 0 : i32
    %c0_i32_0 = arith.constant 0 : i32
    %c0_i32_1 = arith.constant 0 : i32
    return %c0_i32, %c0_i32_0 : i32, i32
  }
  func.func @transform_6(%arg0: i32) -> (i32, i32) {
    %c0_i32 = arith.constant 0 : i32
    %c0_i32_0 = arith.constant 0 : i32
    %c0_i32_1 = arith.constant 0 : i32
    return %c0_i32, %c0_i32_0 : i32, i32
  }
  func.func @transform_7(%arg0: i32) -> (i32, i32) {
    %c0_i32 = arith.constant 0 : i32
    %c0_i32_0 = arith.constant 0 : i32
    %c0_i32_1 = arith.constant 0 : i32
    return %c0_i32, %c0_i32_0 : i32, i32
  }
  func.func @transform_8(%arg0: i32) -> (i32, i32) {
    %c0_i32 = arith.constant 0 : i32
    %c0_i32_0 = arith.constant 0 : i32
    %c0_i32_1 = arith.constant 0 : i32
    return %c0_i32, %c0_i32_0 : i32, i32
  }
  func.func @transform_9(%arg0: i32) -> (i32, i32, i32) {
    %c0_i32 = arith.constant 0 : i32
    %c0_i32_0 = arith.constant 0 : i32
    %c0_i32_1 = arith.constant 0 : i32
    return %arg0, %c0_i32, %c0_i32_0 : i32, i32, i32
  }
}

</mosaic_0001>

<llo_original>
// kernel: tpu_custom_call.1
$region0: #{tpu_custom_call.1}
  #allocation0 [shape = 'u32[]', space=smem, size = 0x4, offset = 0x4, fixed_abs, tag = 'smem constant byte address 0x4 - core index']
  #allocation1 [shape = 'u32[144,128]{1,0:T(1,128)}', space=vmem, size = 0x12000, scoped, tag = 'internal scratch']
  #allocation2 [shape = 'f32[1,1]{1,0:T(1,128)S(6)}', space=smem, size = 0x200, scoped, tag = 'scoped memory for tpu_custom_call.1']
  %s0 = inlined_call_operand.vmem [shape: bf16[128,43], index: 0, kind: input, shape index: {}]
  %s1 = inlined_call_operand.vmem [shape: bf16[128,5], index: 1, kind: input, shape index: {}]
  %s2 = inlined_call_operand.vmem [shape: bf16[43,128], index: 2, kind: input, shape index: {}]
  %s3 = inlined_call_operand.vmem [shape: bf16[5,128], index: 3, kind: input, shape index: {}]
  %s4 = inlined_call_operand.vmem [shape: f32[8,128], index: 4, kind: input, shape index: {}]
  %s5 = inlined_call_operand.vmem [shape: bf16[128,128], index: 5, kind: input, shape index: {}]
  %s6 = inlined_call_operand.vmem [shape: bf16[128,128], index: 6, kind: input, shape index: {}]
  %s7 = inlined_call_operand.vmem [shape: bf16[1,128], index: 7, kind: input, shape index: {}]
  %s8 = inlined_call_operand.<no memory space> [shape: f32[1,1], index: 8, kind: input, shape index: {}]
  %s9 = inlined_call_operand.hbm [shape: f32[1,1,128], index: 9, kind: output, shape index: {}]
  %s10 = sld [smem:[#allocation0]]
  $region46: #{tpu_custom_call.1} parent=0
    _
  %s12 = ssub.s32 1, %s10
  %s13 = scalar_select 0, %s12, %s10
  %14 = sst [smem:[#allocation2]] %s8
  $region1: #{tpu_custom_call.1} parent=0
    #allocation3 [shape = 'u8[512]{0}', space=vmem, size = 0x400, scoped, tag = 'output window, operand 0, single buffered']
    #allocation4 [shape = 's32[1]{0}', space=sflag, size = 0x4, scoped, tag = 'scoped memory for tpu_custom_call.1']
    %15 = vsyncpa [#allocation4], 0
    // Predicated region
    $region2: #{tpu_custom_call.1} parent=1 // pred_check
      _
    $region3: #{tpu_custom_call.1} parent=1 // pred_check_branch
      %17 = sbr.rel (0) target = $region5
    $region4: #{tpu_custom_call.1} parent=1 // pred_region
      _
    $region5: #{tpu_custom_call.1} parent=1 // pred_fallthru
      _
    // Predicated region
    $region6: #{tpu_custom_call.1} parent=1 // pred_check
      _
    $region7: #{tpu_custom_call.1} parent=1 // pred_check_branch
      %19 = sbr.rel (0) target = $region9
    $region8: #{tpu_custom_call.1} parent=1 // pred_region
      _
    $region9: #{tpu_custom_call.1} parent=1 // pred_fallthru
      _
    // Predicated region
    $region10: #{tpu_custom_call.1} parent=1 // pred_check
      _
    $region11: #{tpu_custom_call.1} parent=1 // pred_check_branch
      %21 = sbr.rel (0) target = $region13
    $region12: #{tpu_custom_call.1} parent=1 // pred_region
      _
    $region13: #{tpu_custom_call.1} parent=1 // pred_fallthru
      _
    // Predicated region
    $region14: #{tpu_custom_call.1} parent=1 // pred_check
      _
    $region15: #{tpu_custom_call.1} parent=1 // pred_check_branch
      %23 = sbr.rel (0) target = $region17
    $region16: #{tpu_custom_call.1} parent=1 // pred_region
      _
    $region17: #{tpu_custom_call.1} parent=1 // pred_fallthru
      _
    // Predicated region
    $region18: #{tpu_custom_call.1} parent=1 // pred_check
      _
    $region19: #{tpu_custom_call.1} parent=1 // pred_check_branch
      %25 = sbr.rel (0) target = $region21
    $region20: #{tpu_custom_call.1} parent=1 // pred_region
      _
    $region21: #{tpu_custom_call.1} parent=1 // pred_fallthru
      _
    // Predicated region
    $region22: #{tpu_custom_call.1} parent=1 // pred_check
      _
    $region23: #{tpu_custom_call.1} parent=1 // pred_check_branch
      %27 = sbr.rel (0) target = $region25
    $region24: #{tpu_custom_call.1} parent=1 // pred_region
      _
    $region25: #{tpu_custom_call.1} parent=1 // pred_fallthru
      _
    // Predicated region
    $region26: #{tpu_custom_call.1} parent=1 // pred_check
      _
    $region27: #{tpu_custom_call.1} parent=1 // pred_check_branch
      %29 = sbr.rel (0) target = $region29
    $region28: #{tpu_custom_call.1} parent=1 // pred_region
      _
    $region29: #{tpu_custom_call.1} parent=1 // pred_fallthru
      _
    // Predicated region
    $region30: #{tpu_custom_call.1} parent=1 // pred_check
      _
    $region31: #{tpu_custom_call.1} parent=1 // pred_check_branch
      %31 = sbr.rel (0) target = $region33
    $region32: #{tpu_custom_call.1} parent=1 // pred_region
      _
    $region33: #{tpu_custom_call.1} parent=1 // pred_fallthru
      _
    // Predicated region
    $region34: #{tpu_custom_call.1} parent=1 // pred_check
      _
    $region35: #{tpu_custom_call.1} parent=1 // pred_check_branch
      %33 = sbr.rel (0) target = $region37
    $region36: #{tpu_custom_call.1} parent=1 // pred_region
      _
    $region37: #{tpu_custom_call.1} parent=1 // pred_fallthru
      _
    %v35 = vld [vmem:[%s4] sm:$0x1]
    %v36 = vld [vmem:[%s4 + $0x1] sm:$0x1]
    %v37 = vld [vmem:[%s4 + $0x2] sm:$0x1]
    %v38 = vld [vmem:[%s0] sm:$0xf]
    %v39 = vld [vmem:[%s0 + $0x4] sm:$0xf]
    %v40 = vld [vmem:[%s0 + $0x8] sm:$0xf]
    %v41 = vld [vmem:[%s0 + $0xc] sm:$0xf]
    %v42 = vld [vmem:[%s0 + $0x10] sm:$0xf]
    %v43 = vld [vmem:[%s0 + $0x14] sm:$0xf]
    %v44 = vld [vmem:[%s0 + $0x18] sm:$0xf]
    %v45 = vld [vmem:[%s0 + $0x1c] sm:$0xf]
    %v46 = vld [vmem:[%s0 + $0x20] sm:$0xf]
    %v47 = vld [vmem:[%s0 + $0x24] sm:$0xf]
    %v48 = vld [vmem:[%s0 + $0x28] sm:$0xf]
    %v49 = vld [vmem:[%s0 + $0x2c] sm:$0xf]
    %v50 = vld [vmem:[%s0 + $0x30] sm:$0xf]
    %v51 = vld [vmem:[%s0 + $0x34] sm:$0xf]
    %v52 = vld [vmem:[%s0 + $0x38] sm:$0xf]
    %v53 = vld [vmem:[%s0 + $0x3c] sm:$0xf]
    %v54 = vld [vmem:[%s2] sm:$0xf]
    %v55 = vld [vmem:[%s2 + $0x4] sm:$0xf]
    %v56 = vld [vmem:[%s2 + $0x8] sm:$0xf]
    %v57 = vld [vmem:[%s2 + $0xc] sm:$0xf]
    %v58 = vld [vmem:[%s2 + $0x10] sm:$0xf]
    %v59 = vld [vmem:[%s2 + $0x14] sm:$0x3]
    %v60 = vld [vmem:[%s1] sm:$0xf]
    %v61 = vld [vmem:[%s1 + $0x4] sm:$0xf]
    %v62 = vld [vmem:[%s1 + $0x8] sm:$0xf]
    %v63 = vld [vmem:[%s1 + $0xc] sm:$0xf]
    %v64 = vld [vmem:[%s1 + $0x10] sm:$0xf]
    %v65 = vld [vmem:[%s1 + $0x14] sm:$0xf]
    %v66 = vld [vmem:[%s1 + $0x18] sm:$0xf]
    %v67 = vld [vmem:[%s1 + $0x1c] sm:$0xf]
    %v68 = vld [vmem:[%s1 + $0x20] sm:$0xf]
    %v69 = vld [vmem:[%s1 + $0x24] sm:$0xf]
    %v70 = vld [vmem:[%s1 + $0x28] sm:$0xf]
    %v71 = vld [vmem:[%s1 + $0x2c] sm:$0xf]
    %v72 = vld [vmem:[%s1 + $0x30] sm:$0xf]
    %v73 = vld [vmem:[%s1 + $0x34] sm:$0xf]
    %v74 = vld [vmem:[%s1 + $0x38] sm:$0xf]
    %v75 = vld [vmem:[%s1 + $0x3c] sm:$0xf]
    %v76 = vld [vmem:[%s3] sm:$0x7]
    %v93 = vunpack.c.l.b16 %v60
    %v94 = vunpack.c.l.b16 %v61
    %v95 = vunpack.c.l.b16 %v62
    %v96 = vunpack.c.l.b16 %v63
    %v97 = vunpack.c.l.b16 %v64
    %v98 = vunpack.c.l.b16 %v65
    %v99 = vunpack.c.l.b16 %v66
    %v100 = vunpack.c.l.b16 %v67
    %v101 = vunpack.c.l.b16 %v68
    %v102 = vunpack.c.l.b16 %v69
    %v103 = vunpack.c.l.b16 %v70
    %v104 = vunpack.c.l.b16 %v71
    %v105 = vunpack.c.l.b16 %v72
    %v106 = vunpack.c.l.b16 %v73
    %v107 = vunpack.c.l.b16 %v74
    %v108 = vunpack.c.l.b16 %v75
    %v109 = vpack.c.b16 %v94, %v93
    %v110 = vpack.c.b16 %v96, %v95
    %v111 = vpack.c.b16 %v98, %v97
    %v112 = vpack.c.b16 %v100, %v99
    %v113 = vpack.c.b16 %v102, %v101
    %v114 = vpack.c.b16 %v104, %v103
    %v115 = vpack.c.b16 %v106, %v105
    %v116 = vpack.c.b16 %v108, %v107
    %vm117 = vcmask 39936
    %v119 = vsel %vm117, %v109, 0
    %v122 = vsel %vm117, %v110, 0
    %v125 = vsel %vm117, %v111, 0
    %v128 = vsel %vm117, %v112, 0
    %v131 = vsel %vm117, %v113, 0
    %v134 = vsel %vm117, %v114, 0
    %v137 = vsel %vm117, %v115, 0
    %v140 = vsel %vm117, %v116, 0
    %vm142 = vcmask 1041408
    %vm143 = vcmask 1042432
    %v144 = vsel %vm142, 4294967295, 65535
    %v145 = vsel %vm143, %v144, 0
    %v147 = vand.u32 %v76, %v145
    %149 = vmatprep.subr.bf16.mxu0 0
    %150 = vmatpush1.bf16.msra.mxu0 %v147
    %151 = vmatprep.subr.bf16.mxu0 0
    %152 = vmatpush1.bf16.msra.mxu0 0
    %153 = vmatprep.subr.bf16.mxu0 0
    %154 = vmatpush1.bf16.msra.mxu0 0
    %155 = vmatprep.subr.bf16.mxu0 0
    %156 = vmatpush1.bf16.msra.mxu0 0
    %157 = vmatprep.subr.bf16.mxu0 0
    %158 = vmatpush1.bf16.msra.mxu0 0
    %159 = vmatprep.subr.bf16.mxu0 0
    %160 = vmatpush1.bf16.msra.mxu0 0
    %161 = vmatprep.subr.bf16.mxu0 0
    %162 = vmatpush1.bf16.msra.mxu0 0
    %163 = vmatprep.subr.bf16.mxu0 0
    %164 = vmatpush1.bf16.msra.mxu0 0
    %165 = vmatprep.subr.bf16.mxu0 0
    %166 = vmatpush1.bf16.msra.mxu0 0
    %167 = vmatprep.subr.bf16.mxu0 0
    %168 = vmatpush1.bf16.msra.mxu0 0
    %169 = vmatprep.subr.bf16.mxu0 0
    %170 = vmatpush1.bf16.msra.mxu0 0
    %171 = vmatprep.subr.bf16.mxu0 0
    %172 = vmatpush1.bf16.msra.mxu0 0
    %173 = vmatprep.subr.bf16.mxu0 0
    %174 = vmatpush1.bf16.msra.mxu0 0
    %175 = vmatprep.subr.bf16.mxu0 0
    %176 = vmatpush1.bf16.msra.mxu0 0
    %177 = vmatprep.subr.bf16.mxu0 0
    %178 = vmatpush1.bf16.msra.mxu0 0
    %179 = vmatprep.subr.bf16.mxu0 0
    %180 = vmatpush1.bf16.msra.mxu0 0
    %181 = vmatprep.mubr.bf16.mxu0 0
    %182 = vmatmul.mubr.bf16.gmra.mrb[0].mxu0 %v119
    %v183 = vpop.f32.mrb[0].mxu0
    %v184 = vadd.f32 0.0, %v183
    %v185 = vpop.f32.mrb[0].mxu0
    %v186 = vpop.f32.mrb[0].mxu0
    %v187 = vadd.f32 0.0, %v186
    %v188 = vpop.f32.mrb[0].mxu0
    %189 = vmatprep.mubr.bf16.mxu0 0
    %190 = vmatmul.mubr.bf16.gmra.mrb[0].mxu0 %v122
    %v191 = vpop.f32.mrb[0].mxu0
    %v192 = vadd.f32 0.0, %v191
    %v193 = vpop.f32.mrb[0].mxu0
    %v194 = vpop.f32.mrb[0].mxu0
    %v195 = vadd.f32 0.0, %v194
    %v196 = vpop.f32.mrb[0].mxu0
    %197 = vmatprep.mubr.bf16.mxu0 0
    %198 = vmatmul.mubr.bf16.gmra.mrb[0].mxu0 %v125
    %v199 = vpop.f32.mrb[0].mxu0
    %v200 = vadd.f32 0.0, %v199
    %v201 = vpop.f32.mrb[0].mxu0
    %v202 = vpop.f32.mrb[0].mxu0
    %v203 = vadd.f32 0.0, %v202
    %v204 = vpop.f32.mrb[0].mxu0
    %205 = vmatprep.mubr.bf16.mxu0 0
    %206 = vmatmul.mubr.bf16.gmra.mrb[0].mxu0 %v128
    %v207 = vpop.f32.mrb[0].mxu0
    %v208 = vadd.f32 0.0, %v207
    %v209 = vpop.f32.mrb[0].mxu0
    %v210 = vpop.f32.mrb[0].mxu0
    %v211 = vadd.f32 0.0, %v210
    %v212 = vpop.f32.mrb[0].mxu0
    %213 = vmatprep.mubr.bf16.mxu0 0
    %214 = vmatmul.mubr.bf16.gmra.mrb[0].mxu0 %v131
    %v215 = vpop.f32.mrb[0].mxu0
    %v216 = vadd.f32 0.0, %v215
    %v217 = vpop.f32.mrb[0].mxu0
    %v218 = vpop.f32.mrb[0].mxu0
    %v219 = vadd.f32 0.0, %v218
    %v220 = vpop.f32.mrb[0].mxu0
    %221 = vmatprep.mubr.bf16.mxu0 0
    %222 = vmatmul.mubr.bf16.gmra.mrb[0].mxu0 %v134
    %v223 = vpop.f32.mrb[0].mxu0
    %v224 = vadd.f32 0.0, %v223
    %v225 = vpop.f32.mrb[0].mxu0
    %v226 = vpop.f32.mrb[0].mxu0
    %v227 = vadd.f32 0.0, %v226
    %v228 = vpop.f32.mrb[0].mxu0
    %229 = vmatprep.mubr.bf16.mxu0 0
    %230 = vmatmul.mubr.bf16.gmra.mrb[0].mxu0 %v137
    %v231 = vpop.f32.mrb[0].mxu0
    %v232 = vadd.f32 0.0, %v231
    %v233 = vpop.f32.mrb[0].mxu0
    %v234 = vpop.f32.mrb[0].mxu0
    %v235 = vadd.f32 0.0, %v234
    %v236 = vpop.f32.mrb[0].mxu0
    %237 = vmatprep.mubr.bf16.mxu0 0
    %238 = vmatmul.mubr.bf16.gmra.mrb[0].mxu0 %v140
    %v239 = vpop.f32.mrb[0].mxu0
    %v240 = vadd.f32 0.0, %v239
    %v241 = vpop.f32.mrb[0].mxu0
    %v242 = vpop.f32.mrb[0].mxu0
    %v243 = vadd.f32 0.0, %v242
    %v244 = vpop.f32.mrb[0].mxu0
    %245 = vdwg.mxu0
    %v262 = vunpack.c.l.b16 %v38
    %v263 = vunpack.c.l.b16 %v39
    %v264 = vunpack.c.l.b16 %v40
    %v265 = vunpack.c.l.b16 %v41
    %v266 = vunpack.c.l.b16 %v42
    %v267 = vunpack.c.l.b16 %v43
    %v268 = vunpack.c.l.b16 %v44
    %v269 = vunpack.c.l.b16 %v45
    %v270 = vunpack.c.l.b16 %v46
    %v271 = vunpack.c.l.b16 %v47
    %v272 = vunpack.c.l.b16 %v48
    %v273 = vunpack.c.l.b16 %v49
    %v274 = vunpack.c.l.b16 %v50
    %v275 = vunpack.c.l.b16 %v51
    %v276 = vunpack.c.l.b16 %v52
    %v277 = vunpack.c.l.b16 %v53
    %v278 = vpack.c.b16 %v263, %v262
    %v279 = vpack.c.b16 %v265, %v264
    %v280 = vpack.c.b16 %v267, %v266
    %v281 = vpack.c.b16 %v269, %v268
    %v282 = vpack.c.b16 %v271, %v270
    %v283 = vpack.c.b16 %v273, %v272
    %v284 = vpack.c.b16 %v275, %v274
    %v285 = vpack.c.b16 %v277, %v276
    %v292 = vunpack.c.l.b16 %v54
    %v293 = vunpack.c.l.b16 %v55
    %v294 = vunpack.c.l.b16 %v56
    %v295 = vunpack.c.l.b16 %v57
    %v296 = vunpack.c.l.b16 %v58
    %v297 = vunpack.c.l.b16 %v59
    %v298 = vpack.c.b16 %v293, %v292
    %v299 = vpack.c.b16 %v295, %v294
    %v300 = vpack.c.b16 %v297, %v296
    %vm303 = vcmask 351232
    %v305 = vsel %vm303, %v278, 0
    %v308 = vsel %vm303, %v279, 0
    %v311 = vsel %vm303, %v280, 0
    %v314 = vsel %vm303, %v281, 0
    %v317 = vsel %vm303, %v282, 0
    %v320 = vsel %vm303, %v283, 0
    %v323 = vsel %vm303, %v284, 0
    %v326 = vsel %vm303, %v285, 0
    %vm328 = vcmask 1044480
    %vm329 = vcmask 1045504
    %v330 = vsel %vm328, 4294967295, 65535
    %v331 = vsel %vm329, %v330, 0
    %v333 = vand.u32 %v300, %v331
    %335 = vmatprep.subr.bf16.mxu0 0
    %336 = vmatpush1.bf16.msra.mxu0 %v298
    %337 = vmatprep.subr.bf16.mxu0 0
    %338 = vmatpush1.bf16.msra.mxu0 %v299
    %339 = vmatprep.subr.bf16.mxu0 0
    %340 = vmatpush1.bf16.msra.mxu0 %v333
    %341 = vmatprep.subr.bf16.mxu0 0
    %342 = vmatpush1.bf16.msra.mxu0 0
    %343 = vmatprep.subr.bf16.mxu0 0
    %344 = vmatpush1.bf16.msra.mxu0 0
    %345 = vmatprep.subr.bf16.mxu0 0
    %346 = vmatpush1.bf16.msra.mxu0 0
    %347 = vmatprep.subr.bf16.mxu0 0
    %348 = vmatpush1.bf16.msra.mxu0 0
    %349 = vmatprep.subr.bf16.mxu0 0
    %350 = vmatpush1.bf16.msra.mxu0 0
    %351 = vmatprep.subr.bf16.mxu0 0
    %352 = vmatpush1.bf16.msra.mxu0 0
    %353 = vmatprep.subr.bf16.mxu0 0
    %354 = vmatpush1.bf16.msra.mxu0 0
    %355 = vmatprep.subr.bf16.mxu0 0
    %356 = vmatpush1.bf16.msra.mxu0 0
    %357 = vmatprep.subr.bf16.mxu0 0
    %358 = vmatpush1.bf16.msra.mxu0 0
    %359 = vmatprep.subr.bf16.mxu0 0
    %360 = vmatpush1.bf16.msra.mxu0 0
    %361 = vmatprep.subr.bf16.mxu0 0
    %362 = vmatpush1.bf16.msra.mxu0 0
    %363 = vmatprep.subr.bf16.mxu0 0
    %364 = vmatpush1.bf16.msra.mxu0 0
    %365 = vmatprep.subr.bf16.mxu0 0
    %366 = vmatpush1.bf16.msra.mxu0 0
    %367 = vmatprep.mubr.bf16.mxu0 0
    %368 = vmatmul.mubr.bf16.gmra.mrb[0].mxu0 %v305
    %v369 = vpop.f32.mrb[0].mxu0
    %v370 = vadd.f32 %v184, %v369
    %v371 = vpop.f32.mrb[0].mxu0
    %v372 = vpop.f32.mrb[0].mxu0
    %v373 = vadd.f32 %v187, %v372
    %v374 = vpop.f32.mrb[0].mxu0
    %375 = vmatprep.mubr.bf16.mxu0 0
    %376 = vmatmul.mubr.bf16.gmra.mrb[0].mxu0 %v308
    %v377 = vpop.f32.mrb[0].mxu0
    %v378 = vadd.f32 %v192, %v377
    %v379 = vpop.f32.mrb[0].mxu0
    %v380 = vpop.f32.mrb[0].mxu0
    %v381 = vadd.f32 %v195, %v380
    %v382 = vpop.f32.mrb[0].mxu0
    %383 = vmatprep.mubr.bf16.mxu0 0
    %384 = vmatmul.mubr.bf16.gmra.mrb[0].mxu0 %v311
    %v385 = vpop.f32.mrb[0].mxu0
    %v386 = vadd.f32 %v200, %v385
    %v387 = vpop.f32.mrb[0].mxu0
    %v388 = vpop.f32.mrb[0].mxu0
    %v389 = vadd.f32 %v203, %v388
    %v390 = vpop.f32.mrb[0].mxu0
    %391 = vmatprep.mubr.bf16.mxu0 0
    %392 = vmatmul.mubr.bf16.gmra.mrb[0].mxu0 %v314
    %v393 = vpop.f32.mrb[0].mxu0
    %v394 = vadd.f32 %v208, %v393
    %v395 = vpop.f32.mrb[0].mxu0
    %v396 = vpop.f32.mrb[0].mxu0
    %v397 = vadd.f32 %v211, %v396
    %v398 = vpop.f32.mrb[0].mxu0
    %399 = vmatprep.mubr.bf16.mxu0 0
    %400 = vmatmul.mubr.bf16.gmra.mrb[0].mxu0 %v317
    %v401 = vpop.f32.mrb[0].mxu0
    %v402 = vadd.f32 %v216, %v401
    %v403 = vpop.f32.mrb[0].mxu0
    %v404 = vpop.f32.mrb[0].mxu0
    %v405 = vadd.f32 %v219, %v404
    %v406 = vpop.f32.mrb[0].mxu0
    %407 = vmatprep.mubr.bf16.mxu0 0
    %408 = vmatmul.mubr.bf16.gmra.mrb[0].mxu0 %v320
    %v409 = vpop.f32.mrb[0].mxu0
    %v410 = vadd.f32 %v224, %v409
    %v411 = vpop.f32.mrb[0].mxu0
    %v412 = vpop.f32.mrb[0].mxu0
    %v413 = vadd.f32 %v227, %v412
    %v414 = vpop.f32.mrb[0].mxu0
    %415 = vmatprep.mubr.bf16.mxu0 0
    %416 = vmatmul.mubr.bf16.gmra.mrb[0].mxu0 %v323
    %v417 = vpop.f32.mrb[0].mxu0
    %v418 = vadd.f32 %v232, %v417
    %v419 = vpop.f32.mrb[0].mxu0
    %v420 = vpop.f32.mrb[0].mxu0
    %v421 = vadd.f32 %v235, %v420
    %v422 = vpop.f32.mrb[0].mxu0
    %423 = vmatprep.mubr.bf16.mxu0 0
    %424 = vmatmul.mubr.bf16.gmra.mrb[0].mxu0 %v326
    %v425 = vpop.f32.mrb[0].mxu0
    %v426 = vadd.f32 %v240, %v425
    %v427 = vpop.f32.mrb[0].mxu0
    %v428 = vpop.f32.mrb[0].mxu0
    %v429 = vadd.f32 %v243, %v428
    %v430 = vpop.f32.mrb[0].mxu0
    %431 = vdwg.mxu0
    %v432 = vlaneseq
    %v433 = vshrl.u32 %v432, 7
    %v434 = vsub.s32 0, %v433
    %v435 = vrot.slane %v35, %v434
    %v436 = vadd.f32 %v370, %v435
    %v437 = vadd.f32 %v373, %v435
    %v438 = vadd.f32 %v378, %v435
    %v439 = vadd.f32 %v381, %v435
    %v440 = vadd.f32 %v386, %v435
    %v441 = vadd.f32 %v389, %v435
    %v442 = vadd.f32 %v394, %v435
    %v443 = vadd.f32 %v397, %v435
    %v444 = vadd.f32 %v402, %v435
    %v445 = vadd.f32 %v405, %v435
    %v446 = vadd.f32 %v410, %v435
    %v447 = vadd.f32 %v413, %v435
    %v448 = vadd.f32 %v418, %v435
    %v449 = vadd.f32 %v421, %v435
    %v450 = vadd.f32 %v426, %v435
    %v451 = vadd.f32 %v429, %v435
    %v452 = vmax.f32 %v436, 0.0
    %v453 = vmax.f32 %v437, 0.0
    %v454 = vmax.f32 %v438, 0.0
    %v455 = vmax.f32 %v439, 0.0
    %v456 = vmax.f32 %v440, 0.0
    %v457 = vmax.f32 %v441, 0.0
    %v458 = vmax.f32 %v442, 0.0
    %v459 = vmax.f32 %v443, 0.0
    %v460 = vmax.f32 %v444, 0.0
    %v461 = vmax.f32 %v445, 0.0
    %v462 = vmax.f32 %v446, 0.0
    %v463 = vmax.f32 %v447, 0.0
    %v464 = vmax.f32 %v448, 0.0
    %v465 = vmax.f32 %v449, 0.0
    %v466 = vmax.f32 %v450, 0.0
    %v467 = vmax.f32 %v451, 0.0
    %v468 = vpack.c.bf16 %v453, %v452
    %v469 = vpack.c.bf16 %v455, %v454
    %v470 = vpack.c.bf16 %v457, %v456
    %v471 = vpack.c.bf16 %v459, %v458
    %v472 = vpack.c.bf16 %v461, %v460
    %v473 = vpack.c.bf16 %v463, %v462
    %v474 = vpack.c.bf16 %v465, %v464
    %v475 = vpack.c.bf16 %v467, %v466
    %v476 = vld [vmem:[%s5] sm:$0xf]
    %v477 = vld [vmem:[%s5 + $0x4] sm:$0xf]
    %v478 = vld [vmem:[%s5 + $0x8] sm:$0xf]
    %v479 = vld [vmem:[%s5 + $0xc] sm:$0xf]
    %v480 = vld [vmem:[%s5 + $0x10] sm:$0xf]
    %v481 = vld [vmem:[%s5 + $0x14] sm:$0xf]
    %v482 = vld [vmem:[%s5 + $0x18] sm:$0xf]
    %v483 = vld [vmem:[%s5 + $0x1c] sm:$0xf]
    %v484 = vld [vmem:[%s5 + $0x20] sm:$0xf]
    %v485 = vld [vmem:[%s5 + $0x24] sm:$0xf]
    %v486 = vld [vmem:[%s5 + $0x28] sm:$0xf]
    %v487 = vld [vmem:[%s5 + $0x2c] sm:$0xf]
    %v488 = vld [vmem:[%s5 + $0x30] sm:$0xf]
    %v489 = vld [vmem:[%s5 + $0x34] sm:$0xf]
    %v490 = vld [vmem:[%s5 + $0x38] sm:$0xf]
    %v491 = vld [vmem:[%s5 + $0x3c] sm:$0xf]
    %v492 = vlaneseq
    %v493 = vshrl.u32 %v492, 7
    %v494 = vsub.s32 0, %v493
    %v495 = vrot.slane %v36, %v494
    %v512 = vunpack.c.l.b16 %v476
    %v513 = vunpack.c.l.b16 %v477
    %v514 = vunpack.c.l.b16 %v478
    %v515 = vunpack.c.l.b16 %v479
    %v516 = vunpack.c.l.b16 %v480
    %v517 = vunpack.c.l.b16 %v481
    %v518 = vunpack.c.l.b16 %v482
    %v519 = vunpack.c.l.b16 %v483
    %v520 = vunpack.c.l.b16 %v484
    %v521 = vunpack.c.l.b16 %v485
    %v522 = vunpack.c.l.b16 %v486
    %v523 = vunpack.c.l.b16 %v487
    %v524 = vunpack.c.l.b16 %v488
    %v525 = vunpack.c.l.b16 %v489
    %v526 = vunpack.c.l.b16 %v490
    %v527 = vunpack.c.l.b16 %v491
    %v528 = vpack.c.b16 %v513, %v512
    %v529 = vpack.c.b16 %v515, %v514
    %v530 = vpack.c.b16 %v517, %v516
    %v531 = vpack.c.b16 %v519, %v518
    %v532 = vpack.c.b16 %v521, %v520
    %v533 = vpack.c.b16 %v523, %v522
    %v534 = vpack.c.b16 %v525, %v524
    %v535 = vpack.c.b16 %v527, %v526
    %544 = vmatprep.subr.bf16.mxu0 0
    %545 = vmatpush1.bf16.msra.mxu0 %v528
    %546 = vmatprep.subr.bf16.mxu0 0
    %547 = vmatpush1.bf16.msra.mxu0 %v529
    %548 = vmatprep.subr.bf16.mxu0 0
    %549 = vmatpush1.bf16.msra.mxu0 %v530
    %550 = vmatprep.subr.bf16.mxu0 0
    %551 = vmatpush1.bf16.msra.mxu0 %v531
    %552 = vmatprep.subr.bf16.mxu0 0
    %553 = vmatpush1.bf16.msra.mxu0 %v532
    %554 = vmatprep.subr.bf16.mxu0 0
    %555 = vmatpush1.bf16.msra.mxu0 %v533
    %556 = vmatprep.subr.bf16.mxu0 0
    %557 = vmatpush1.bf16.msra.mxu0 %v534
    %558 = vmatprep.subr.bf16.mxu0 0
    %559 = vmatpush1.bf16.msra.mxu0 %v535
    %560 = vmatprep.subr.bf16.mxu0 0
    %561 = vmatpush1.bf16.msra.mxu0 0
    %562 = vmatprep.subr.bf16.mxu0 0
    %563 = vmatpush1.bf16.msra.mxu0 0
    %564 = vmatprep.subr.bf16.mxu0 0
    %565 = vmatpush1.bf16.msra.mxu0 0
    %566 = vmatprep.subr.bf16.mxu0 0
    %567 = vmatpush1.bf16.msra.mxu0 0
    %568 = vmatprep.subr.bf16.mxu0 0
    %569 = vmatpush1.bf16.msra.mxu0 0
    %570 = vmatprep.subr.bf16.mxu0 0
    %571 = vmatpush1.bf16.msra.mxu0 0
    %572 = vmatprep.subr.bf16.mxu0 0
    %573 = vmatpush1.bf16.msra.mxu0 0
    %574 = vmatprep.subr.bf16.mxu0 0
    %575 = vmatpush1.bf16.msra.mxu0 0
    %576 = vmatprep.mubr.bf16.mxu0 0
    %577 = vmatmul.mubr.bf16.gmra.mrb[0].mxu0 %v468
    %v578 = vpop.f32.mrb[0].mxu0
    %v579 = vadd.f32 %v495, %v578
    %v580 = vpop.f32.mrb[0].mxu0
    %v581 = vpop.f32.mrb[0].mxu0
    %v582 = vadd.f32 %v495, %v581
    %v583 = vpop.f32.mrb[0].mxu0
    %584 = vmatprep.mubr.bf16.mxu0 0
    %585 = vmatmul.mubr.bf16.gmra.mrb[0].mxu0 %v469
    %v586 = vpop.f32.mrb[0].mxu0
    %v587 = vadd.f32 %v495, %v586
    %v588 = vpop.f32.mrb[0].mxu0
    %v589 = vpop.f32.mrb[0].mxu0
    %v590 = vadd.f32 %v495, %v589
    %v591 = vpop.f32.mrb[0].mxu0
    %592 = vmatprep.mubr.bf16.mxu0 0
    %593 = vmatmul.mubr.bf16.gmra.mrb[0].mxu0 %v470
    %v594 = vpop.f32.mrb[0].mxu0
    %v595 = vadd.f32 %v495, %v594
    %v596 = vpop.f32.mrb[0].mxu0
    %v597 = vpop.f32.mrb[0].mxu0
    %v598 = vadd.f32 %v495, %v597
    %v599 = vpop.f32.mrb[0].mxu0
    %600 = vmatprep.mubr.bf16.mxu0 0
    %601 = vmatmul.mubr.bf16.gmra.mrb[0].mxu0 %v471
    %v602 = vpop.f32.mrb[0].mxu0
    %v603 = vadd.f32 %v495, %v602
    %v604 = vpop.f32.mrb[0].mxu0
    %v605 = vpop.f32.mrb[0].mxu0
    %v606 = vadd.f32 %v495, %v605
    %v607 = vpop.f32.mrb[0].mxu0
    %608 = vmatprep.mubr.bf16.mxu0 0
    %609 = vmatmul.mubr.bf16.gmra.mrb[0].mxu0 %v472
    %v610 = vpop.f32.mrb[0].mxu0
    %v611 = vadd.f32 %v495, %v610
    %v612 = vpop.f32.mrb[0].mxu0
    %v613 = vpop.f32.mrb[0].mxu0
    %v614 = vadd.f32 %v495, %v613
    %v615 = vpop.f32.mrb[0].mxu0
    %616 = vmatprep.mubr.bf16.mxu0 0
    %617 = vmatmul.mubr.bf16.gmra.mrb[0].mxu0 %v473
    %v618 = vpop.f32.mrb[0].mxu0
    %v619 = vadd.f32 %v495, %v618
    %v620 = vpop.f32.mrb[0].mxu0
    %v621 = vpop.f32.mrb[0].mxu0
    %v622 = vadd.f32 %v495, %v621
    %v623 = vpop.f32.mrb[0].mxu0
    %624 = vmatprep.mubr.bf16.mxu0 0
    %625 = vmatmul.mubr.bf16.gmra.mrb[0].mxu0 %v474
    %v626 = vpop.f32.mrb[0].mxu0
    %v627 = vadd.f32 %v495, %v626
    %v628 = vpop.f32.mrb[0].mxu0
    %v629 = vpop.f32.mrb[0].mxu0
    %v630 = vadd.f32 %v495, %v629
    %v631 = vpop.f32.mrb[0].mxu0
    %632 = vmatprep.mubr.bf16.mxu0 0
    %633 = vmatmul.mubr.bf16.gmra.mrb[0].mxu0 %v475
    %v634 = vpop.f32.mrb[0].mxu0
    %v635 = vadd.f32 %v495, %v634
    %v636 = vpop.f32.mrb[0].mxu0
    %v637 = vpop.f32.mrb[0].mxu0
    %v638 = vadd.f32 %v495, %v637
    %v639 = vpop.f32.mrb[0].mxu0
    %640 = vdwg.mxu0
    %v641 = vmax.f32 %v579, 0.0
    %v642 = vmax.f32 %v582, 0.0
    %v643 = vmax.f32 %v587, 0.0
    %v644 = vmax.f32 %v590, 0.0
    %v645 = vmax.f32 %v595, 0.0
    %v646 = vmax.f32 %v598, 0.0
    %v647 = vmax.f32 %v603, 0.0
    %v648 = vmax.f32 %v606, 0.0
    %v649 = vmax.f32 %v611, 0.0
    %v650 = vmax.f32 %v614, 0.0
    %v651 = vmax.f32 %v619, 0.0
    %v652 = vmax.f32 %v622, 0.0
    %v653 = vmax.f32 %v627, 0.0
    %v654 = vmax.f32 %v630, 0.0
    %v655 = vmax.f32 %v635, 0.0
    %v656 = vmax.f32 %v638, 0.0
    %v657 = vpack.c.bf16 %v642, %v641
    %v658 = vpack.c.bf16 %v644, %v643
    %v659 = vpack.c.bf16 %v646, %v645
    %v660 = vpack.c.bf16 %v648, %v647
    %v661 = vpack.c.bf16 %v650, %v649
    %v662 = vpack.c.bf16 %v652, %v651
    %v663 = vpack.c.bf16 %v654, %v653
    %v664 = vpack.c.bf16 %v656, %v655
    %v665 = vld [vmem:[%s6] sm:$0xf]
    %v666 = vld [vmem:[%s6 + $0x4] sm:$0xf]
    %v667 = vld [vmem:[%s6 + $0x8] sm:$0xf]
    %v668 = vld [vmem:[%s6 + $0xc] sm:$0xf]
    %v669 = vld [vmem:[%s6 + $0x10] sm:$0xf]
    %v670 = vld [vmem:[%s6 + $0x14] sm:$0xf]
    %v671 = vld [vmem:[%s6 + $0x18] sm:$0xf]
    %v672 = vld [vmem:[%s6 + $0x1c] sm:$0xf]
    %v673 = vld [vmem:[%s6 + $0x20] sm:$0xf]
    %v674 = vld [vmem:[%s6 + $0x24] sm:$0xf]
    %v675 = vld [vmem:[%s6 + $0x28] sm:$0xf]
    %v676 = vld [vmem:[%s6 + $0x2c] sm:$0xf]
    %v677 = vld [vmem:[%s6 + $0x30] sm:$0xf]
    %v678 = vld [vmem:[%s6 + $0x34] sm:$0xf]
    %v679 = vld [vmem:[%s6 + $0x38] sm:$0xf]
    %v680 = vld [vmem:[%s6 + $0x3c] sm:$0xf]
    %v681 = vlaneseq
    %v682 = vshrl.u32 %v681, 7
    %v683 = vsub.s32 0, %v682
    %v684 = vrot.slane %v37, %v683
    %v701 = vunpack.c.l.b16 %v665
    %v702 = vunpack.c.l.b16 %v666
    %v703 = vunpack.c.l.b16 %v667
    %v704 = vunpack.c.l.b16 %v668
    %v705 = vunpack.c.l.b16 %v669
    %v706 = vunpack.c.l.b16 %v670
    %v707 = vunpack.c.l.b16 %v671
    %v708 = vunpack.c.l.b16 %v672
    %v709 = vunpack.c.l.b16 %v673
    %v710 = vunpack.c.l.b16 %v674
    %v711 = vunpack.c.l.b16 %v675
    %v712 = vunpack.c.l.b16 %v676
    %v713 = vunpack.c.l.b16 %v677
    %v714 = vunpack.c.l.b16 %v678
    %v715 = vunpack.c.l.b16 %v679
    %v716 = vunpack.c.l.b16 %v680
    %v717 = vpack.c.b16 %v702, %v701
    %v718 = vpack.c.b16 %v704, %v703
    %v719 = vpack.c.b16 %v706, %v705
    %v720 = vpack.c.b16 %v708, %v707
    %v721 = vpack.c.b16 %v710, %v709
    %v722 = vpack.c.b16 %v712, %v711
    %v723 = vpack.c.b16 %v714, %v713
    %v724 = vpack.c.b16 %v716, %v715
    %733 = vmatprep.subr.bf16.mxu0 0
    %734 = vmatpush1.bf16.msra.mxu0 %v717
    %735 = vmatprep.subr.bf16.mxu0 0
    %736 = vmatpush1.bf16.msra.mxu0 %v718
    %737 = vmatprep.subr.bf16.mxu0 0
    %738 = vmatpush1.bf16.msra.mxu0 %v719
    %739 = vmatprep.subr.bf16.mxu0 0
    %740 = vmatpush1.bf16.msra.mxu0 %v720
    %741 = vmatprep.subr.bf16.mxu0 0
    %742 = vmatpush1.bf16.msra.mxu0 %v721
    %743 = vmatprep.subr.bf16.mxu0 0
    %744 = vmatpush1.bf16.msra.mxu0 %v722
    %745 = vmatprep.subr.bf16.mxu0 0
    %746 = vmatpush1.bf16.msra.mxu0 %v723
    %747 = vmatprep.subr.bf16.mxu0 0
    %748 = vmatpush1.bf16.msra.mxu0 %v724
    %749 = vmatprep.subr.bf16.mxu0 0
    %750 = vmatpush1.bf16.msra.mxu0 0
    %751 = vmatprep.subr.bf16.mxu0 0
    %752 = vmatpush1.bf16.msra.mxu0 0
    %753 = vmatprep.subr.bf16.mxu0 0
    %754 = vmatpush1.bf16.msra.mxu0 0
    %755 = vmatprep.subr.bf16.mxu0 0
    %756 = vmatpush1.bf16.msra.mxu0 0
    %757 = vmatprep.subr.bf16.mxu0 0
    %758 = vmatpush1.bf16.msra.mxu0 0
    %759 = vmatprep.subr.bf16.mxu0 0
    %760 = vmatpush1.bf16.msra.mxu0 0
    %761 = vmatprep.subr.bf16.mxu0 0
    %762 = vmatpush1.bf16.msra.mxu0 0
    %763 = vmatprep.subr.bf16.mxu0 0
    %764 = vmatpush1.bf16.msra.mxu0 0
    %765 = vmatprep.mubr.bf16.mxu0 0
    %766 = vmatmul.mubr.bf16.gmra.mrb[0].mxu0 %v657
    %v767 = vpop.f32.mrb[0].mxu0
    %v768 = vadd.f32 %v684, %v767
    %v769 = vpop.f32.mrb[0].mxu0
    %v770 = vpop.f32.mrb[0].mxu0
    %v771 = vadd.f32 %v684, %v770
    %v772 = vpop.f32.mrb[0].mxu0
    %773 = vmatprep.mubr.bf16.mxu0 0
    %774 = vmatmul.mubr.bf16.gmra.mrb[0].mxu0 %v658
    %v775 = vpop.f32.mrb[0].mxu0
    %v776 = vadd.f32 %v684, %v775
    %v777 = vpop.f32.mrb[0].mxu0
    %v778 = vpop.f32.mrb[0].mxu0
    %v779 = vadd.f32 %v684, %v778
    %v780 = vpop.f32.mrb[0].mxu0
    %781 = vmatprep.mubr.bf16.mxu0 0
    %782 = vmatmul.mubr.bf16.gmra.mrb[0].mxu0 %v659
    %v783 = vpop.f32.mrb[0].mxu0
    %v784 = vadd.f32 %v684, %v783
    %v785 = vpop.f32.mrb[0].mxu0
    %v786 = vpop.f32.mrb[0].mxu0
    %v787 = vadd.f32 %v684, %v786
    %v788 = vpop.f32.mrb[0].mxu0
    %789 = vmatprep.mubr.bf16.mxu0 0
    %790 = vmatmul.mubr.bf16.gmra.mrb[0].mxu0 %v660
    %v791 = vpop.f32.mrb[0].mxu0
    %v792 = vadd.f32 %v684, %v791
    %v793 = vpop.f32.mrb[0].mxu0
    %v794 = vpop.f32.mrb[0].mxu0
    %v795 = vadd.f32 %v684, %v794
    %v796 = vpop.f32.mrb[0].mxu0
    %797 = vmatprep.mubr.bf16.mxu0 0
    %798 = vmatmul.mubr.bf16.gmra.mrb[0].mxu0 %v661
    %v799 = vpop.f32.mrb[0].mxu0
    %v800 = vadd.f32 %v684, %v799
    %v801 = vpop.f32.mrb[0].mxu0
    %v802 = vpop.f32.mrb[0].mxu0
    %v803 = vadd.f32 %v684, %v802
    %v804 = vpop.f32.mrb[0].mxu0
    %805 = vmatprep.mubr.bf16.mxu0 0
    %806 = vmatmul.mubr.bf16.gmra.mrb[0].mxu0 %v662
    %v807 = vpop.f32.mrb[0].mxu0
    %v808 = vadd.f32 %v684, %v807
    %v809 = vpop.f32.mrb[0].mxu0
    %v810 = vpop.f32.mrb[0].mxu0
    %v811 = vadd.f32 %v684, %v810
    %v812 = vpop.f32.mrb[0].mxu0
    %813 = vmatprep.mubr.bf16.mxu0 0
    %814 = vmatmul.mubr.bf16.gmra.mrb[0].mxu0 %v663
    %v815 = vpop.f32.mrb[0].mxu0
    %v816 = vadd.f32 %v684, %v815
    %v817 = vpop.f32.mrb[0].mxu0
    %v818 = vpop.f32.mrb[0].mxu0
    %v819 = vadd.f32 %v684, %v818
    %v820 = vpop.f32.mrb[0].mxu0
    %821 = vmatprep.mubr.bf16.mxu0 0
    %822 = vmatmul.mubr.bf16.gmra.mrb[0].mxu0 %v664
    %v823 = vpop.f32.mrb[0].mxu0
    %v824 = vadd.f32 %v684, %v823
    %v825 = vpop.f32.mrb[0].mxu0
    %v826 = vpop.f32.mrb[0].mxu0
    %v827 = vadd.f32 %v684, %v826
    %v828 = vpop.f32.mrb[0].mxu0
    %829 = vdwg.mxu0
    %v830 = vmax.f32 %v768, 0.0
    %v831 = vmax.f32 %v771, 0.0
    %v832 = vmax.f32 %v776, 0.0
    %v833 = vmax.f32 %v779, 0.0
    %v834 = vmax.f32 %v784, 0.0
    %v835 = vmax.f32 %v787, 0.0
    %v836 = vmax.f32 %v792, 0.0
    %v837 = vmax.f32 %v795, 0.0
    %v838 = vmax.f32 %v800, 0.0
    %v839 = vmax.f32 %v803, 0.0
    %v840 = vmax.f32 %v808, 0.0
    %v841 = vmax.f32 %v811, 0.0
    %v842 = vmax.f32 %v816, 0.0
    %v843 = vmax.f32 %v819, 0.0
    %v844 = vmax.f32 %v824, 0.0
    %v845 = vmax.f32 %v827, 0.0
    %v846 = vpack.c.bf16 %v831, %v830
    %v847 = vpack.c.bf16 %v833, %v832
    %v848 = vpack.c.bf16 %v835, %v834
    %v849 = vpack.c.bf16 %v837, %v836
    %v850 = vpack.c.bf16 %v839, %v838
    %v851 = vpack.c.bf16 %v841, %v840
    %v852 = vpack.c.bf16 %v843, %v842
    %v853 = vpack.c.bf16 %v845, %v844
    %v854 = vld [vmem:[%s7] sm:$0x1]
    %s855 = sld [smem:[#allocation2]]
    %v856 = vstv %s855
    %857 = vmatprep.subr.bf16.mxu0 0
    %858 = vmatpush1.bf16.xpose.msra.mxu0 %v846
    %859 = vmatprep.subr.bf16.mxu0 0
    %860 = vmatpush1.bf16.xpose.msra.mxu0 %v847
    %861 = vmatprep.subr.bf16.mxu0 0
    %862 = vmatpush1.bf16.xpose.msra.mxu0 %v848
    %863 = vmatprep.subr.bf16.mxu0 0
    %864 = vmatpush1.bf16.xpose.msra.mxu0 %v849
    %865 = vmatprep.subr.bf16.mxu0 0
    %866 = vmatpush1.bf16.xpose.msra.mxu0 %v850
    %867 = vmatprep.subr.bf16.mxu0 0
    %868 = vmatpush1.bf16.xpose.msra.mxu0 %v851
    %869 = vmatprep.subr.bf16.mxu0 0
    %870 = vmatpush1.bf16.xpose.msra.mxu0 %v852
    %871 = vmatprep.subr.bf16.mxu0 0
    %872 = vmatpush1.bf16.xpose.msra.mxu0 %v853
    %873 = vmatprep.subr.bf16.mxu0 0
    %874 = vmatpush1.bf16.xpose.msra.mxu0 0
    %875 = vmatprep.subr.bf16.mxu0 0
    %876 = vmatpush1.bf16.xpose.msra.mxu0 0
    %877 = vmatprep.subr.bf16.mxu0 0
    %878 = vmatpush1.bf16.xpose.msra.mxu0 0
    %879 = vmatprep.subr.bf16.mxu0 0
    %880 = vmatpush1.bf16.xpose.msra.mxu0 0
    %881 = vmatprep.subr.bf16.mxu0 0
    %882 = vmatpush1.bf16.xpose.msra.mxu0 0
    %883 = vmatprep.subr.bf16.mxu0 0
    %884 = vmatpush1.bf16.xpose.msra.mxu0 0
    %885 = vmatprep.subr.bf16.mxu0 0
    %886 = vmatpush1.bf16.xpose.msra.mxu0 0
    %887 = vmatprep.subr.bf16.mxu0 0
    %888 = vmatpush1.bf16.xpose.msra.mxu0 0
    %889 = vmatprep.mubr.bf16.mxu0 0
    %890 = vmatmul.mubr.bf16.gmra.mrb[0].mxu0 %v854
    %v891 = vpop.f32.mrb[0].mxu0
    %v892 = vadd.f32 %v856, %v891
    %v893 = vpop.f32.mrb[0].mxu0
    %v894 = vpop.f32.mrb[0].mxu0
    %v895 = vpop.f32.mrb[0].mxu0
    %896 = vdwg.mxu0
    %897 = vst [vmem:[#allocation3] sm:$0x1] %v892
    // Predicated region
    $region38: #{tpu_custom_call.1} parent=1 // pred_check
      _
    $region39: #{tpu_custom_call.1} parent=1 // pred_check_branch
      %899 = sbr.rel (0) target = $region41
    $region40: #{tpu_custom_call.1} parent=1 // pred_region
      %s901 = ssub.s32 16, 16
      %902 = vsyncadd [#allocation4], %s901
      %s904 = sshll.u32 [#allocation3], 4
      %s905 = int_to_ptr.vmem [resolvable:$true] %s904
      %907 = dma.vmem_to_hbm [thread:$0]  %s905, 16, %s9, [#allocation4]
    $region41: #{tpu_custom_call.1} parent=1 // pred_fallthru
      _
    // Predicated region
    $region42: #{tpu_custom_call.1} parent=1 // pred_check
      _
    $region43: #{tpu_custom_call.1} parent=1 // pred_check_branch
      %909 = sbr.rel (0) target = $region45
    $region44: #{tpu_custom_call.1} parent=1 // pred_region
      %910 = dma.done [#allocation4], 16
    $region45: #{tpu_custom_call.1} parent=1 // pred_fallthru
      _
    %911 = vsyncpa [#allocation4], 1

</llo_original>
